<compile_context>
chip_gen: v7x
topology: tpu7x:2x2x1
jax: 0.10.0
libtpu: 0.0.40
codegen_flags: <defaults>
</compile_context>

<pallas_src>
import functools

import jax
import jax.numpy as jnp
from jax.experimental import pallas as pl
from jax.experimental.pallas import tpu as pltpu


def _round_up(x, m):
    return (x + m - 1) // m * m


# ----------------------------------------------------------------------------------
# Kernel 1: every conv (one deep MXU contraction) + bias + tanh + max-over-sequence
# ----------------------------------------------------------------------------------
def _conv_pool_kernel(x_ref, w_ref, b_ref, o_ref, win_ref, *, Kmax, L, cin):
    """One batch element.

    x_ref   : (1, L + 2*(Kmax//2), Cin) bf16  input, zero-padded once for largest filter
    w_ref   : (Kmax*Cin, D_pad)         bf16  all conv filters, row-offset + concatenated
    b_ref   : (1, D_pad)                f32   concatenated conv biases (zero in padding)
    o_ref   : (1, 1, D_pad)             bf16  pooled (max over L) features
    win_ref : (L, Kmax*Cin)             bf16  shared im2col window (VMEM scratch)
    """
    # Build the shared im2col window with static shifted copies. Refs are sliced
    # directly (no whole-array vreg materialization of x).
    for k in range(Kmax):
        win_ref[:, k * cin:(k + 1) * cin] = x_ref[0, k:k + L, :]

    # ONE deep contraction for every filter size: bf16 operands, f32 accumulate.
    y = jnp.dot(win_ref[...], w_ref[...], preferred_element_type=jnp.float32)
    y = jnp.tanh(y + b_ref[...])                                  # (L, D_pad) f32 epilogue
    o_ref[0] = jnp.max(y, axis=0, keepdims=True).astype(o_ref.dtype)


# ----------------------------------------------------------------------------------
# Kernel 2: final Linear, batched over B (hoisted out of the per-batch grid)
# ----------------------------------------------------------------------------------
def _final_linear_kernel(m_ref, w_ref, b_ref, o_ref):
    """(B, D_pad) x (D_pad, NL_pad) + bias -> f32 logits (lane-dense NL_pad)."""
    o_ref[...] = (jnp.dot(m_ref[...], w_ref[...], preferred_element_type=jnp.float32)
                  + b_ref[...])


# ----------------------------------------------------------------------------------
# Wrapper
# ----------------------------------------------------------------------------------
def multi_cnn_logits(x, conv_ws_flat, conv_bs, final_w_t, final_b, *, filter_sizes):
    """x: (B, L, Cin) f32 word embeddings -> logits (B, num_labels) f32."""
    filter_sizes = tuple(int(fs) for fs in filter_sizes)
    # PyTorch Conv1d with padding=fs//2 only gives output length L for odd fs.
    assert all(fs % 2 == 1 for fs in filter_sizes), "only odd filter sizes supported"

    B, L, Cin = x.shape
    Cout = conv_ws_flat[0].shape[1]
    n = len(filter_sizes)
    D = n * Cout
    NL = final_w_t.shape[1]
    Kmax = max(filter_sizes)
    max_pad = Kmax // 2
    Lp = L + 2 * max_pad
    D_pad = _round_up(D, 128)        # lane-dense conv output / pooled store width
    NL_pad = _round_up(NL, 128)      # lane-dense logits store in the final matmul

    # Pad activations ONCE (largest filter's 'same' padding) and cast to bf16:
    # halves input DMA + window scratch, feeds the MXU directly.
    xp = jnp.pad(x, ((0, 0), (max_pad, max_pad), (0, 0))).astype(jnp.bfloat16)

    # Fuse every conv weight into one (Kmax*Cin, D_pad) matrix: filter fs occupies the
    # row band [(max_pad - fs//2)*Cin : (max_pad - fs//2 + fs)*Cin] and its own Cout
    # column band; the rest is zero, so one shared im2col window serves all filters.
    w_comb = jnp.zeros((Kmax * Cin, D_pad), jnp.float32)
    b_comb = jnp.zeros((1, D_pad), jnp.float32)
    for i, (fs, w, bias) in enumerate(zip(filter_sizes, conv_ws_flat, conv_bs)):
        off = max_pad - fs // 2
        w_comb = w_comb.at[off * Cin:(off + fs) * Cin, i * Cout:(i + 1) * Cout].set(w)
        b_comb = b_comb.at[0, i * Cout:(i + 1) * Cout].set(bias)
    w_comb = w_comb.astype(jnp.bfloat16)

    kernel = functools.partial(_conv_pool_kernel, Kmax=Kmax, L=L, cin=Cin)

    pooled = pl.pallas_call(
        kernel,
        out_shape=jax.ShapeDtypeStruct((B, 1, D_pad), jnp.bfloat16),
        grid=(B,),
        in_specs=[
            pl.BlockSpec((1, Lp, Cin), lambda b: (b, 0, 0)),
            # TODO(synk): at MIMIC scale single-buffer these grid-invariant weights
            # (pipeline_mode=pl.Buffered(1)); double-buffering constants is pure VMEM
            # waste on v7x's 64 MiB.
            pl.BlockSpec((Kmax * Cin, D_pad), lambda b: (0, 0)),
            pl.BlockSpec((1, D_pad), lambda b: (0, 0)),
        ],
        out_specs=pl.BlockSpec((1, 1, D_pad), lambda b: (b, 0, 0)),
        scratch_shapes=[pltpu.VMEM((L, Kmax * Cin), jnp.bfloat16)],
        compiler_params=pltpu.CompilerParams(
            dimension_semantics=("parallel",),   # batch rows shard across TCs (v7x)
            vmem_limit_bytes=32 * 1024 * 1024,
        ),
        # TODO(synk): at MIMIC scale (L~3000) add an innermost "arbitrary" L-tile grid
        # axis (~512 rows, multiple of 8) carrying the running max in a small VMEM
        # scratch (init with pl.when at tile 0, write out on the last tile) so the
        # shared window stays ~1 MB bf16 and input DMA overlaps the conv matmul.
    )(xp, w_comb, b_comb)

    # Final Linear hoisted out of the per-batch grid: ONE batched MXU matmul over the
    # whole pooled block instead of B re-loads of the (D, NL) weight at M=1.
    wf = jnp.zeros((D_pad, NL_pad), jnp.float32).at[:D, :NL].set(final_w_t)
    bf = jnp.zeros((1, NL_pad), jnp.float32).at[0, :NL].set(final_b)
    logits_pad = pl.pallas_call(
        _final_linear_kernel,
        out_shape=jax.ShapeDtypeStruct((B, NL_pad), jnp.float32),
        # TODO(synk): at MIMIC scale (D~500, NL~9000) tile this (128, D)x(D, 256) with
        # a grid instead of whole-array blocks.
    )(pooled.reshape(B, D_pad), wf.astype(jnp.bfloat16), bf)
    return logits_pad[:, :NL]


# ----------------------------------------------------------------------------------
# Parameter construction (deterministic, synthetic; mirrors torch inits)
# ----------------------------------------------------------------------------------
def _xavier_uniform_conv(key, k, cin, cout):
    # torch xavier_uniform_ on weight (cout, cin, k): fan_in = cin*k, fan_out = cout*k
    bound = float(jnp.sqrt(6.0 / (cin * k + cout * k)))
    w = jax.random.uniform(key, (k, cin, cout), minval=-bound, maxval=bound)
    return w.reshape(k * cin, cout)          # (k, cin)-major flatten to match im2col


def make_params(key, *, vocab, feature_size, num_filter_maps, filter_sizes, num_labels):
    keys = iter(jax.random.split(key, 32))
    params = {
        "embedding": 0.1 * jax.random.normal(next(keys), (vocab, feature_size)),
        "conv_w": [], "conv_b": [],
    }
    for fs in filter_sizes:
        params["conv_w"].append(
            _xavier_uniform_conv(next(keys), fs, feature_size, num_filter_maps))
        bound = 1.0 / float(jnp.sqrt(feature_size * fs))   # torch Conv1d default bias init
        params["conv_b"].append(jax.random.uniform(
            next(keys), (num_filter_maps,), minval=-bound, maxval=bound))
    D = len(filter_sizes) * num_filter_maps
    std = float(jnp.sqrt(2.0 / (D + num_labels)))          # xavier_normal_ on final weight
    w_final = std * jax.random.normal(next(keys), (num_labels, D))
    params["final_w_t"] = w_final.T                        # (D, num_labels)
    bound = 1.0 / float(jnp.sqrt(D))
    params["final_b"] = jax.random.uniform(next(keys), (num_labels,),
                                           minval=-bound, maxval=bound)
    return params


# ----------------------------------------------------------------------------------
# Forward pass (mirrors MultiCNN.forward, eval mode, no attention / label embeddings)
# ----------------------------------------------------------------------------------
def multi_cnn_forward(tokens, target, params, *, filter_sizes):
    # WordRep: embedding lookup (dropout = identity in eval).
    # TODO(synk): the gather stays in plain JAX; the attention / embed_labels branches
    # are not exercised (use_attention=False, embed_labels=False).
    x = jnp.take(params["embedding"], tokens, axis=0)                  # (B, L, F) f32

    logits = multi_cnn_logits(x, params["conv_w"], params["conv_b"],
                              params["final_w_t"], params["final_b"],
                              filter_sizes=filter_sizes)               # (B, NL)

    # BCEWithLogitsLoss (mean reduction), numerically stable
    z, t = logits, target
    loss = jnp.mean(jnp.maximum(z, 0.0) - z * t + jnp.log1p(jnp.exp(-jnp.abs(z))))
    return {"output": jax.nn.sigmoid(logits), "loss": loss}


# Pure-JAX f32 reference of the same forward (for a relaxed-tolerance check).
def _reference_forward(tokens, target, params, *, filter_sizes):
    x = jnp.take(params["embedding"], tokens, axis=0)
    B, L, F = x.shape
    outs = []
    for fs, w, b in zip(filter_sizes, params["conv_w"], params["conv_b"]):
        pad = fs // 2
        xp = jnp.pad(x, ((0, 0), (pad, pad), (0, 0)))
        win = jnp.stack([xp[:, k:k + L, :] for k in range(fs)], axis=2)  # (B, L, fs, F)
        outs.append(jnp.tanh(win.reshape(B, L, fs * F) @ w + b))         # (B, L, Cout)
    feat = jnp.concatenate(outs, axis=2)                                 # (B, L, D)
    m = jnp.max(feat, axis=1)                                            # (B, D)
    logits = m @ params["final_w_t"] + params["final_b"]
    z, t = logits, target
    loss = jnp.mean(jnp.maximum(z, 0.0) - z * t + jnp.log1p(jnp.exp(-jnp.abs(z))))
    return {"output": jax.nn.sigmoid(logits), "loss": loss}


# ----------------------------------------------------------------------------------
if __name__ == "__main__":
    B, L = 2, 16
    VOCAB, FEATURE = 50, 32
    NUM_FILTER_MAPS = 32
    FILTER_SIZES = (3, 5)          # args.filter_size = "3,5"
    NUM_LABELS = 8

    key = jax.random.PRNGKey(0)
    kp, kt, ky = jax.random.split(key, 3)

    params = make_params(kp, vocab=VOCAB, feature_size=FEATURE,
                         num_filter_maps=NUM_FILTER_MAPS,
                         filter_sizes=FILTER_SIZES, num_labels=NUM_LABELS)

    tokens = jax.random.randint(kt, (B, L), 0, VOCAB)
    target = jax.random.bernoulli(ky, 0.3, (B, NUM_LABELS)).astype(jnp.float32)

    out = multi_cnn_forward(tokens, target, params, filter_sizes=FILTER_SIZES)
    jax.block_until_ready(out["output"])
    jax.block_until_ready(out["loss"])

    assert out["output"].shape == (B, NUM_LABELS)
    assert out["loss"].shape == ()
    assert bool(jnp.all(jnp.isfinite(out["output"])))
    assert bool(jnp.isfinite(out["loss"]))

    # Relaxed tolerance vs f32 reference (kernel uses bf16 MXU operands, f32 accumulate).
    ref = _reference_forward(tokens, target, params, filter_sizes=FILTER_SIZES)
    assert bool(jnp.max(jnp.abs(out["output"] - ref["output"])) < 5e-2)
    assert bool(jnp.abs(out["loss"] - ref["loss"]) < 5e-2)

    print("KERNEL_OK")
</pallas_src>

<mosaic_0001>
module attributes {stable_mosaic.version = 11 : i64} {
  func.func @_conv_pool_kernel(%arg0: i32, %arg1: memref<1x20x32xbf16, #tpu.memory_space<vmem>>, %arg2: memref<160x128xbf16, #tpu.memory_space<vmem>>, %arg3: memref<1x128xf32, #tpu.memory_space<vmem>>, %arg4: memref<1x1x128xbf16, #tpu.memory_space<vmem>>, %arg5: memref<16x160xbf16, #tpu.memory_space<vmem>>) attributes {dimension_semantics = [#tpu.dimension_semantics<parallel>], iteration_bounds = array<i64: 2>, scalar_prefetch = 0 : i64, scratch_operands = 1 : i64, tpu.core_type = #tpu.core_type<tc>, window_params = [{transform_indices = @transform_0, window_bounds = array<i64: 1, 20, 32>}, {pipeline_mode = #tpu.pipeline_mode<synchronous>, transform_indices = @transform_1, window_bounds = array<i64: 160, 128>}, {pipeline_mode = #tpu.pipeline_mode<synchronous>, transform_indices = @transform_2, window_bounds = array<i64: 1, 128>}, {transform_indices = @transform_3, window_bounds = array<i64: 1, 1, 128>}]} {
    %c0 = arith.constant 0 : index
    %c0_0 = arith.constant 0 : index
    %c0_1 = arith.constant 0 : index
    %0 = vector.load %arg1[%c0, %c0_0, %c0_1] : memref<1x20x32xbf16, #tpu.memory_space<vmem>>, vector<1x16x32xbf16>
    %1 = vector.shape_cast %0 : vector<1x16x32xbf16> to vector<16x32xbf16>
    %c0_2 = arith.constant 0 : index
    %c0_3 = arith.constant 0 : index
    %2 = vector.load %arg5[%c0_2, %c0_3] : memref<16x160xbf16, #tpu.memory_space<vmem>>, vector<16x32xbf16>
    tpu.vector_store %arg5[%c0_2, %c0_3], %1 {strides = array<i32>} : memref<16x160xbf16, #tpu.memory_space<vmem>>, vector<16x32xbf16>,
    %c0_4 = arith.constant 0 : index
    %c1 = arith.constant 1 : index
    %c0_5 = arith.constant 0 : index
    %3 = vector.load %arg1[%c0_4, %c1, %c0_5] : memref<1x20x32xbf16, #tpu.memory_space<vmem>>, vector<1x16x32xbf16>
    %4 = vector.shape_cast %3 : vector<1x16x32xbf16> to vector<16x32xbf16>
    %c0_6 = arith.constant 0 : index
    %c32 = arith.constant 32 : index
    %5 = vector.load %arg5[%c0_6, %c32] : memref<16x160xbf16, #tpu.memory_space<vmem>>, vector<16x32xbf16>
    tpu.vector_store %arg5[%c0_6, %c32], %4 {strides = array<i32>} : memref<16x160xbf16, #tpu.memory_space<vmem>>, vector<16x32xbf16>,
    %c0_7 = arith.constant 0 : index
    %c2 = arith.constant 2 : index
    %c0_8 = arith.constant 0 : index
    %6 = vector.load %arg1[%c0_7, %c2, %c0_8] : memref<1x20x32xbf16, #tpu.memory_space<vmem>>, vector<1x16x32xbf16>
    %7 = vector.shape_cast %6 : vector<1x16x32xbf16> to vector<16x32xbf16>
    %c0_9 = arith.constant 0 : index
    %c64 = arith.constant 64 : index
    %8 = vector.load %arg5[%c0_9, %c64] : memref<16x160xbf16, #tpu.memory_space<vmem>>, vector<16x32xbf16>
    tpu.vector_store %arg5[%c0_9, %c64], %7 {strides = array<i32>} : memref<16x160xbf16, #tpu.memory_space<vmem>>, vector<16x32xbf16>,
    %c0_10 = arith.constant 0 : index
    %c3 = arith.constant 3 : index
    %c0_11 = arith.constant 0 : index
    %9 = vector.load %arg1[%c0_10, %c3, %c0_11] : memref<1x20x32xbf16, #tpu.memory_space<vmem>>, vector<1x16x32xbf16>
    %10 = vector.shape_cast %9 : vector<1x16x32xbf16> to vector<16x32xbf16>
    %c0_12 = arith.constant 0 : index
    %c96 = arith.constant 96 : index
    %11 = vector.load %arg5[%c0_12, %c96] : memref<16x160xbf16, #tpu.memory_space<vmem>>, vector<16x32xbf16>
    tpu.vector_store %arg5[%c0_12, %c96], %10 {strides = array<i32>} : memref<16x160xbf16, #tpu.memory_space<vmem>>, vector<16x32xbf16>,
    %c0_13 = arith.constant 0 : index
    %c4 = arith.constant 4 : index
    %c0_14 = arith.constant 0 : index
    %12 = vector.load %arg1[%c0_13, %c4, %c0_14] : memref<1x20x32xbf16, #tpu.memory_space<vmem>>, vector<1x16x32xbf16>
    %13 = vector.shape_cast %12 : vector<1x16x32xbf16> to vector<16x32xbf16>
    %c0_15 = arith.constant 0 : index
    %c128 = arith.constant 128 : index
    %14 = vector.load %arg5[%c0_15, %c128] : memref<16x160xbf16, #tpu.memory_space<vmem>>, vector<16x32xbf16>
    tpu.vector_store %arg5[%c0_15, %c128], %13 {strides = array<i32>} : memref<16x160xbf16, #tpu.memory_space<vmem>>, vector<16x32xbf16>,
    %c0_16 = arith.constant 0 : index
    %c0_17 = arith.constant 0 : index
    %15 = vector.load %arg5[%c0_16, %c0_17] : memref<16x160xbf16, #tpu.memory_space<vmem>>, vector<16x160xbf16>
    %c0_18 = arith.constant 0 : index
    %c0_19 = arith.constant 0 : index
    %16 = vector.load %arg2[%c0_18, %c0_19] : memref<160x128xbf16, #tpu.memory_space<vmem>>, vector<160x128xbf16>
    %cst = arith.constant dense<0.000000e+00> : vector<16x128xf32>
    %17 = tpu.matmul %15, %16, %cst {dimension_numbers = #tpu.dot_dimension_numbers<[1], [0], [0], [1], [0, 0, 1, 1], [], []>} : vector<16x160xbf16>, vector<160x128xbf16>, vector<16x128xf32> -> vector<16x128xf32>
    %c0_20 = arith.constant 0 : index
    %c0_21 = arith.constant 0 : index
    %18 = vector.load %arg3[%c0_20, %c0_21] : memref<1x128xf32, #tpu.memory_space<vmem>>, vector<1x128xf32>
    %19 = vector.broadcast %18 : vector<1x128xf32> to vector<16x128xf32>
    %20 = arith.addf %17, %19 : vector<16x128xf32>
    %21 = math.tanh %20 : vector<16x128xf32>
    %cst_22 = arith.constant dense<0xFF800000> : vector<128xf32>
    %22 = vector.multi_reduction <maximumf>, %21, %cst_22 [0] : vector<16x128xf32> to vector<128xf32>
    %23 = vector.shape_cast %22 : vector<128xf32> to vector<1x128xf32>
    %24 = arith.truncf %23 : vector<1x128xf32> to vector<1x128xbf16>
    %c0_23 = arith.constant 0 : index
    %c0_24 = arith.constant 0 : index
    %c0_25 = arith.constant 0 : index
    %25 = vector.load %arg4[%c0_23, %c0_24, %c0_25] : memref<1x1x128xbf16, #tpu.memory_space<vmem>>, vector<1x1x128xbf16>
    %26 = vector.shape_cast %25 : vector<1x1x128xbf16> to vector<1x128xbf16>
    %27 = vector.shape_cast %24 : vector<1x128xbf16> to vector<1x1x128xbf16>
    tpu.vector_store %arg4[%c0_23, %c0_24, %c0_25], %27 {strides = array<i32>} : memref<1x1x128xbf16, #tpu.memory_space<vmem>>, vector<1x1x128xbf16>,
    return
  }
  func.func @transform_0(%arg0: i32) -> (i32, i32, i32) {
    %c0_i32 = arith.constant 0 : i32
    %c0_i32_0 = arith.constant 0 : i32
    %c0_i32_1 = arith.constant 0 : i32
    return %arg0, %c0_i32, %c0_i32_0 : i32, i32, i32
  }
  func.func @transform_1(%arg0: i32) -> (i32, i32) {
    %c0_i32 = arith.constant 0 : i32
    %c0_i32_0 = arith.constant 0 : i32
    %c0_i32_1 = arith.constant 0 : i32
    return %c0_i32, %c0_i32_0 : i32, i32
  }
  func.func @transform_2(%arg0: i32) -> (i32, i32) {
    %c0_i32 = arith.constant 0 : i32
    %c0_i32_0 = arith.constant 0 : i32
    %c0_i32_1 = arith.constant 0 : i32
    return %c0_i32, %c0_i32_0 : i32, i32
  }
  func.func @transform_3(%arg0: i32) -> (i32, i32, i32) {
    %c0_i32 = arith.constant 0 : i32
    %c0_i32_0 = arith.constant 0 : i32
    %c0_i32_1 = arith.constant 0 : i32
    return %arg0, %c0_i32, %c0_i32_0 : i32, i32, i32
  }
}

</mosaic_0001>

<llo_original>
// kernel: tpu_custom_call.1
$region0: #{tpu_custom_call.1}
  #allocation0 [shape = 'u32[]', space=smem, size = 0x4, offset = 0x4, fixed_abs, tag = 'smem constant byte address 0x4 - core index']
  #allocation1 [shape = 'u32[144,128]{1,0:T(1,128)}', space=vmem, size = 0x12000, scoped, tag = 'internal scratch']
  #allocation2 [shape = 'bf16[16,160]{1,0:T(16,128)(2,1)}', space=vmem, size = 0x2000, scoped, tag = 'scratch operand']
  %s0 = inlined_call_operand.vmem [shape: bf16[2,20,32], index: 0, kind: input, shape index: {}]
  %s1 = inlined_call_operand.hbm [shape: bf16[160,128], index: 1, kind: input, shape index: {}]
  %s2 = inlined_call_operand.vmem [shape: f32[1,128], index: 2, kind: input, shape index: {}]
  %s3 = inlined_call_operand.vmem [shape: bf16[2,1,128], index: 3, kind: output, shape index: {}]
  %s4 = sld [smem:[#allocation0]]
  $region49: #{tpu_custom_call.1} parent=0
    _
  %s6 = ssub.s32 1, %s4
  %s7 = scalar_select 0, %s6, %s4
  $region1: #{tpu_custom_call.1} parent=0
    #allocation3 [shape = 'u8[40960]{0}', space=vmem, size = 0xa000, scoped, tag = 'input window, operand 1, single buffered']
    #allocation4 [shape = 's32[2]{0}', space=sflag, size = 0x8, scoped, tag = 'scoped memory for tpu_custom_call.1']
    %8 = vsyncpa [#allocation4], 0
    loop: start=0, step=1, limit=4
    $region2: #{tpu_custom_call.1} parent=1 // loop_pre_header
      _
    $region3: #{tpu_custom_call.1} parent=1 // loop_header
      %s10 = sphi 0, %s14
      %p11 = scmp.ge.s32.totalorder %s10, 4
      %s20 = sphi 0, %s22
      %s23 = sphi 0, %s20
      %s24 = sphi 0, %s23
      %s40 = sphi 0, %s24
      %s44 = sphi 0, %s44
      %s46 = sphi 0, %s44
      %s47 = sphi 0, %s46
      %s61 = sphi 0, %s47
      %s65 = sphi 0, %s65
      %s67 = sphi 0, %s65
      %s68 = sphi 0, %s67
      %s82 = sphi 0, %s68
      %s88 = sphi 0, %s90
      %s91 = sphi 0, %s88
      %s92 = sphi 0, %s91
      %s108 = sphi 0, %s92
    $region4: #{tpu_custom_call.1} parent=1 // loop_header_branch
      %13 = sbr.rel (%p11) target = $region8
    $region5: #{tpu_custom_call.1} parent=1 // loop_body
      %s15 = ssub.s32 %s10, 1
      %s16 = ssub.s32 %s10, 2
      %s17 = sadd.s32 %s10, 1
      %s18 = ssub.s32 %s10, %s17
      %p19 = scmp.eq.s32.totalorder %s18, 0
      %s21 = sadd.s32 %s20, 1
      %s22 = scalar_select %p19, %s20, %s21
      %p25 = pneg %p19
      %p26 = scmp.eq.s32.totalorder %s10, 1
      %p27 = por %p25, %p26
      %p28 = scmp.ne.s32.totalorder %s20, %s23
      %p29 = scmp.eq.s32.totalorder %s10, 0
      %p30 = por %p28, %p29
      %p31 = scmp.ne.s32.totalorder %s20, %s23
      %p32 = scmp.eq.s32.totalorder %s15, 1
      %p33 = por %p31, %p32
      %p34 = scmp.ne.s32.totalorder %s23, %s24
      %p35 = scmp.eq.s32.totalorder %s15, 0
      %p36 = por %p34, %p35
      %p37 = scmp.ne.s32.totalorder %s23, %s24
      %p38 = scmp.eq.s32.totalorder %s16, 1
      %p39 = por %p37, %p38
      %p41 = scmp.ne.s32.totalorder %s24, %s40
      %p42 = scmp.eq.s32.totalorder %s16, 0
      %p43 = por %p41, %p42
      %s45 = sadd.s32 %s44, 1
      %p48 = scmp.eq.s32.totalorder %s10, 1
      %p49 = scmp.ne.s32.totalorder %s44, %s46
      %p50 = scmp.eq.s32.totalorder %s10, 0
      %p51 = por %p49, %p50
      %p52 = scmp.ne.s32.totalorder %s44, %s46
      %p53 = scmp.eq.s32.totalorder %s15, 1
      %p54 = por %p52, %p53
      %p55 = scmp.ne.s32.totalorder %s46, %s47
      %p56 = scmp.eq.s32.totalorder %s15, 0
      %p57 = por %p55, %p56
      %p58 = scmp.ne.s32.totalorder %s46, %s47
      %p59 = scmp.eq.s32.totalorder %s16, 1
      %p60 = por %p58, %p59
      %p62 = scmp.ne.s32.totalorder %s47, %s61
      %p63 = scmp.eq.s32.totalorder %s16, 0
      %p64 = por %p62, %p63
      %s66 = sadd.s32 %s65, 1
      %p69 = scmp.eq.s32.totalorder %s10, 1
      %p70 = scmp.ne.s32.totalorder %s65, %s67
      %p71 = scmp.eq.s32.totalorder %s10, 0
      %p72 = por %p70, %p71
      %p73 = scmp.ne.s32.totalorder %s65, %s67
      %p74 = scmp.eq.s32.totalorder %s15, 1
      %p75 = por %p73, %p74
      %p76 = scmp.ne.s32.totalorder %s67, %s68
      %p77 = scmp.eq.s32.totalorder %s15, 0
      %p78 = por %p76, %p77
      %p79 = scmp.ne.s32.totalorder %s67, %s68
      %p80 = scmp.eq.s32.totalorder %s16, 1
      %p81 = por %p79, %p80
      %p83 = scmp.ne.s32.totalorder %s68, %s82
      %p84 = scmp.eq.s32.totalorder %s16, 0
      %p85 = por %p83, %p84
      %s86 = ssub.s32 %s10, %s17
      %p87 = scmp.eq.s32.totalorder %s86, 0
      %s89 = sadd.s32 %s88, 1
      %s90 = scalar_select %p87, %s88, %s89
      %p93 = pneg %p87
      %p94 = scmp.eq.s32.totalorder %s10, 1
      %p95 = por %p93, %p94
      %p96 = scmp.ne.s32.totalorder %s88, %s91
      %p97 = scmp.eq.s32.totalorder %s10, 0
      %p98 = por %p96, %p97
      %p99 = scmp.ne.s32.totalorder %s88, %s91
      %p100 = scmp.eq.s32.totalorder %s15, 1
      %p101 = por %p99, %p100
      %p102 = scmp.ne.s32.totalorder %s91, %s92
      %p103 = scmp.eq.s32.totalorder %s15, 0
      %p104 = por %p102, %p103
      %p105 = scmp.ne.s32.totalorder %s91, %s92
      %p106 = scmp.eq.s32.totalorder %s16, 1
      %p107 = por %p105, %p106
      %p109 = scmp.ne.s32.totalorder %s92, %s108
      %p110 = scmp.eq.s32.totalorder %s16, 0
      %p111 = por %p109, %p110
      %p112 = scmp.le.s32.totalorder 1, %s10
      %p113 = scmp.lt.s32.totalorder %s10, 3
      %p114 = pnand %p112, %p113
      %p115 = pneg %p114
      // Predicated region
      $region9: #{tpu_custom_call.1} parent=5 // pred_check
        _
      $region10: #{tpu_custom_call.1} parent=5 // pred_check_branch
        %117 = sbr.rel (%p114) target = $region12
      $region11: #{tpu_custom_call.1} parent=5 // pred_region
        %s118 = ssub.s32 %s10, 1
        // Predicated region
        $region13: #{tpu_custom_call.1} parent=11 // pred_check
          %p119 = pneg %p57
        $region14: #{tpu_custom_call.1} parent=11 // pred_check_branch
          %121 = sbr.rel (%p119) target = $region16
        $region15: #{tpu_custom_call.1} parent=11 // pred_region
          %s123 = ssub.s32 1280, 1280
          %124 = vsyncadd [#allocation4], %s123
          %s125 = sshll.u32 [#allocation3], 4
          %s126 = int_to_ptr.vmem [resolvable:$true] %s125
          %131 = dma.hbm_to_vmem [thread:$0]  %s1, 1280, %s126, [#allocation4], 64, 64, 4
        $region16: #{tpu_custom_call.1} parent=11 // pred_fallthru
          _
        // Predicated region
        $region17: #{tpu_custom_call.1} parent=11 // pred_check
          %p132 = pneg %p78
        $region18: #{tpu_custom_call.1} parent=11 // pred_check_branch
          %134 = sbr.rel (%p132) target = $region20
        $region19: #{tpu_custom_call.1} parent=11 // pred_region
          _
        $region20: #{tpu_custom_call.1} parent=11 // pred_fallthru
          _
      $region12: #{tpu_custom_call.1} parent=5 // pred_fallthru
        _
      %p135 = scmp.lt.s32.totalorder %s10, 2
      // Predicated region
      $region21: #{tpu_custom_call.1} parent=5 // pred_check
        %p136 = pneg %p135
      $region22: #{tpu_custom_call.1} parent=5 // pred_check_branch
        %138 = sbr.rel (%p136) target = $region24
      $region23: #{tpu_custom_call.1} parent=5 // pred_region
        // Predicated region
        $region25: #{tpu_custom_call.1} parent=23 // pred_check
          %p139 = pneg %p30
        $region26: #{tpu_custom_call.1} parent=23 // pred_check_branch
          %141 = sbr.rel (%p139) target = $region28
        $region27: #{tpu_custom_call.1} parent=23 // pred_region
          %p142 = scmp.lt.s32.totalorder %s10, 1
          %s143 = scalar_select %p142, %s10, 1
          %s144 = smul.addr %s143, 3
          %s145 = smul.addr %s144, 4
          %s146 = scalar_lea.vmem %s0, %s145
        $region28: #{tpu_custom_call.1} parent=23 // pred_fallthru
          _
      $region24: #{tpu_custom_call.1} parent=5 // pred_fallthru
        _
      %p147 = scmp.le.s32.totalorder 1, %s10
      %p148 = scmp.lt.s32.totalorder %s10, 3
      %p149 = pnand %p147, %p148
      %p150 = pneg %p149
      // Predicated region
      $region29: #{tpu_custom_call.1} parent=5 // pred_check
        _
      $region30: #{tpu_custom_call.1} parent=5 // pred_check_branch
        %152 = sbr.rel (%p149) target = $region32
      $region31: #{tpu_custom_call.1} parent=5 // pred_region
        %s153 = ssub.s32 %s10, 1
        // Predicated region
        $region33: #{tpu_custom_call.1} parent=31 // pred_check
          %p154 = pneg %p57
        $region34: #{tpu_custom_call.1} parent=31 // pred_check_branch
          %156 = sbr.rel (%p154) target = $region36
        $region35: #{tpu_custom_call.1} parent=31 // pred_region
          %157 = dma.done [#allocation4], 1280
        $region36: #{tpu_custom_call.1} parent=31 // pred_fallthru
          _
        %p158 = scmp.lt.s32.totalorder %s15, 1
        %s159 = scalar_select %p158, %s15, 1
        %s160 = smul.addr %s159, 3
        %s161 = smul.addr %s160, 4
        %s162 = scalar_lea.vmem %s0, %s161
        %p163 = pneg %p36
        %p164 = pneg %p33
        %p165 = pneg %p57
        %p166 = pneg %p54
        %p167 = pneg %p78
        %p168 = pneg %p75
        %p169 = pneg %p104
        %p170 = pneg %p101
        %p171 = scmp.lt.s32.totalorder %s15, 1
        %s172 = scalar_select %p171, %s15, 1
        %s173 = scalar_lea.vmem %s3, %s172
        %p174 = scmp.lt.s32.totalorder %s15, 1
        %s175 = scalar_select %p174, %s15, 1
        %s176 = smul.addr %s175, 3
        %s177 = smul.addr %s176, 4
        %s178 = scalar_lea.vmem %s0, %s177
        %p179 = scmp.lt.s32.totalorder %s15, 1
        %s180 = scalar_select %p179, %s15, 1
        %s181 = scalar_lea.vmem %s3, %s180
        %v183 = vld [vmem:[%s178] sm:$0xf]
        %v184 = vld [vmem:[%s178 + $0x4] sm:$0xf]
        %v187 = vunpack.c.l.b16 %v183
        %v188 = vunpack.c.l.b16 %v184
        %v189 = vpack.c.b16 %v188, %v187
        %vm191 = vcmask 261120
        %192 = vst.msk [vmem:[#allocation2] sm:$0xff] %vm191, %v189
        %v193 = vld [vmem:[%s178] sm:$0xf]
        %v194 = vld [vmem:[%s178 + $0x4] sm:$0xf]
        %v195 = vld [vmem:[%s178 + $0x8] sm:$0x1]
        %v199 = vunpack.c.l.b16 %v193
        %v200 = vunpack.c.l.b16 %v194
        %v201 = vunpack.c.l.b16 %v195
        %v202 = vpack.c.b16 %v200, %v199
        %v203 = vpack.c.b16 %v201, %v201
        %vm204 = vsmask.f32 7424
        %v206 = vshrl.u32 %v202, 16
        %v208 = vshll.u32 %v202, 16
        %v210 = vrot.slane %v208, 1
        %v211 = vor.u32 %v206, %v210
        %v213 = vshll.u32 %v203, 16
        %v215 = vrot.slane %v213, 1
        %v216 = vsel %vm204, %v211, %v215
        %217 = vrot.lane.b32.xlu0 %v216, 32
        %v218 = vpop.permute.xlu0 %217
        %vm220 = vcmask 523520
        %221 = vst.msk [vmem:[#allocation2] sm:$0xff] %vm220, %v218
        %v222 = vld [vmem:[%s178] sm:$0xe]
        %v223 = vld [vmem:[%s178 + $0x4] sm:$0xf]
        %v224 = vld [vmem:[%s178 + $0x8] sm:$0x1]
        %v228 = vunpack.c.l.b16 %v222
        %v229 = vunpack.c.l.b16 %v223
        %v230 = vunpack.c.l.b16 %v224
        %v231 = vpack.c.b16 %v229, %v228
        %v232 = vpack.c.b16 %v230, %v230
        %vm233 = vcmask 1046528
        %v234 = vrot.slane %v231, 1
        %v235 = vrot.slane %v232, 1
        %v236 = vsel %vm233, %v234, %v235
        %237 = vrot.lane.b32.xlu0 %v236, 64
        %v238 = vpop.permute.xlu0 %237
        %vm240 = vcmask 785920
        %241 = vst.msk [vmem:[#allocation2] sm:$0xff] %vm240, %v238
        %v242 = vld [vmem:[%s178] sm:$0xe]
        %v243 = vld [vmem:[%s178 + $0x4] sm:$0xf]
        %v244 = vld [vmem:[%s178 + $0x8] sm:$0x3]
        %v248 = vunpack.c.l.b16 %v242
        %v249 = vunpack.c.l.b16 %v243
        %v250 = vunpack.c.l.b16 %v244
        %v251 = vpack.c.b16 %v249, %v248
        %v252 = vpack.c.b16 %v250, %v250
        %vm253 = vsmask.f32 6400
        %v255 = vshrl.u32 %v251, 16
        %v257 = vrot.slane %v255, 1
        %v258 = vshll.u32 %v251, 16
        %v260 = vrot.slane %v258, 2
        %v261 = vor.u32 %v257, %v260
        %v263 = vshrl.u32 %v252, 16
        %v265 = vrot.slane %v263, 1
        %v266 = vshll.u32 %v252, 16
        %v268 = vrot.slane %v266, 2
        %v269 = vor.u32 %v265, %v268
        %v270 = vsel %vm253, %v261, %v269
        %271 = vrot.lane.b32.xlu0 %v270, 96
        %v272 = vpop.permute.xlu0 %271
        %vm274 = vcmask 1048320
        %275 = vst.msk [vmem:[#allocation2] sm:$0xff] %vm274, %v272
        %v276 = vld [vmem:[%s178] sm:$0xc]
        %v277 = vld [vmem:[%s178 + $0x4] sm:$0xf]
        %v278 = vld [vmem:[%s178 + $0x8] sm:$0x3]
        %v282 = vunpack.c.l.b16 %v276
        %v283 = vunpack.c.l.b16 %v277
        %v284 = vunpack.c.l.b16 %v278
        %v285 = vpack.c.b16 %v283, %v282
        %v286 = vpack.c.b16 %v284, %v284
        %vm287 = vcmask 1045504
        %v288 = vrot.slane %v285, 2
        %v289 = vrot.slane %v286, 2
        %v290 = vsel %vm287, %v288, %v289
        %292 = vst.msk [vmem:[#allocation2 + $0x8] sm:$0xff] %vm191, %v290
        %v293 = vld [vmem:[#allocation2] sm:$0xff]
        %v294 = vld [vmem:[#allocation2 + $0x8] sm:$0xff]
        %v295 = vld [vmem:[#allocation3] sm:$0xf]
        %v296 = vld [vmem:[#allocation3 + $0x4] sm:$0xf]
        %v297 = vld [vmem:[#allocation3 + $0x8] sm:$0xf]
        %v298 = vld [vmem:[#allocation3 + $0xc] sm:$0xf]
        %v299 = vld [vmem:[#allocation3 + $0x10] sm:$0xf]
        %v300 = vld [vmem:[#allocation3 + $0x14] sm:$0xf]
        %v301 = vld [vmem:[#allocation3 + $0x18] sm:$0xf]
        %v302 = vld [vmem:[#allocation3 + $0x1c] sm:$0xf]
        %v303 = vld [vmem:[#allocation3 + $0x20] sm:$0xf]
        %v304 = vld [vmem:[#allocation3 + $0x24] sm:$0xf]
        %v305 = vld [vmem:[#allocation3 + $0x28] sm:$0xf]
        %v306 = vld [vmem:[#allocation3 + $0x2c] sm:$0xf]
        %v307 = vld [vmem:[#allocation3 + $0x30] sm:$0xf]
        %v308 = vld [vmem:[#allocation3 + $0x34] sm:$0xf]
        %v309 = vld [vmem:[#allocation3 + $0x38] sm:$0xf]
        %v310 = vld [vmem:[#allocation3 + $0x3c] sm:$0xf]
        %v311 = vld [vmem:[#allocation3 + $0x40] sm:$0xf]
        %v312 = vld [vmem:[#allocation3 + $0x44] sm:$0xf]
        %v313 = vld [vmem:[#allocation3 + $0x48] sm:$0xf]
        %v314 = vld [vmem:[#allocation3 + $0x4c] sm:$0xf]
        %v315 = vld [vmem:[%s2] sm:$0x1]
        %v317 = vlaneseq
        %v318 = vshrl.u32 %v317, 7
        %v319 = vsub.s32 0, %v318
        %v320 = vrot.slane %v315, %v319
        %v342 = vunpack.c.l.b16 %v295
        %v343 = vunpack.c.l.b16 %v296
        %v344 = vunpack.c.l.b16 %v297
        %v345 = vunpack.c.l.b16 %v298
        %v346 = vunpack.c.l.b16 %v299
        %v347 = vunpack.c.l.b16 %v300
        %v348 = vunpack.c.l.b16 %v301
        %v349 = vunpack.c.l.b16 %v302
        %v350 = vunpack.c.l.b16 %v303
        %v351 = vunpack.c.l.b16 %v304
        %v352 = vunpack.c.l.b16 %v305
        %v353 = vunpack.c.l.b16 %v306
        %v354 = vunpack.c.l.b16 %v307
        %v355 = vunpack.c.l.b16 %v308
        %v356 = vunpack.c.l.b16 %v309
        %v357 = vunpack.c.l.b16 %v310
        %v358 = vunpack.c.l.b16 %v311
        %v359 = vunpack.c.l.b16 %v312
        %v360 = vunpack.c.l.b16 %v313
        %v361 = vunpack.c.l.b16 %v314
        %v362 = vpack.c.b16 %v343, %v342
        %v363 = vpack.c.b16 %v345, %v344
        %v364 = vpack.c.b16 %v347, %v346
        %v365 = vpack.c.b16 %v349, %v348
        %v366 = vpack.c.b16 %v351, %v350
        %v367 = vpack.c.b16 %v353, %v352
        %v368 = vpack.c.b16 %v355, %v354
        %v369 = vpack.c.b16 %v357, %v356
        %v370 = vpack.c.b16 %v359, %v358
        %v371 = vpack.c.b16 %v361, %v360
        %v383 = vsel %vm191, %v294, 0
        %385 = vmatprep.subr.bf16.mxu0 0
        %386 = vmatpush1.bf16.msra.mxu0 %v362
        %387 = vmatprep.subr.bf16.mxu0 0
        %388 = vmatpush1.bf16.msra.mxu0 %v363
        %389 = vmatprep.subr.bf16.mxu0 0
        %390 = vmatpush1.bf16.msra.mxu0 %v364
        %391 = vmatprep.subr.bf16.mxu0 0
        %392 = vmatpush1.bf16.msra.mxu0 %v365
        %393 = vmatprep.subr.bf16.mxu0 0
        %394 = vmatpush1.bf16.msra.mxu0 %v366
        %395 = vmatprep.subr.bf16.mxu0 0
        %396 = vmatpush1.bf16.msra.mxu0 %v367
        %397 = vmatprep.subr.bf16.mxu0 0
        %398 = vmatpush1.bf16.msra.mxu0 %v368
        %399 = vmatprep.subr.bf16.mxu0 0
        %400 = vmatpush1.bf16.msra.mxu0 %v369
        %401 = vmatprep.subr.bf16.mxu0 0
        %402 = vmatpush1.bf16.msra.mxu0 %v370
        %403 = vmatprep.subr.bf16.mxu0 0
        %404 = vmatpush1.bf16.msra.mxu0 %v371
        %405 = vmatprep.subr.bf16.mxu0 0
        %406 = vmatpush1.bf16.msra.mxu0 0
        %407 = vmatprep.subr.bf16.mxu0 0
        %408 = vmatpush1.bf16.msra.mxu0 0
        %409 = vmatprep.subr.bf16.mxu0 0
        %410 = vmatpush1.bf16.msra.mxu0 0
        %411 = vmatprep.subr.bf16.mxu0 0
        %412 = vmatpush1.bf16.msra.mxu0 0
        %413 = vmatprep.subr.bf16.mxu0 0
        %414 = vmatpush1.bf16.msra.mxu0 0
        %415 = vmatprep.subr.bf16.mxu0 0
        %416 = vmatpush1.bf16.msra.mxu0 0
        %417 = vmatprep.mubr.bf16.mxu0 %v383
        %418 = vmatmul.mubr.bf16.gmra.mrb[0].mxu0 %v293
        %v419 = vpop.f32.mrb[0].mxu0
        %v420 = vadd.f32 %v320, %v419
        %v421 = vpop.f32.mrb[0].mxu0
        %v422 = vpop.f32.mrb[0].mxu0
        %v423 = vadd.f32 %v320, %v422
        %v424 = vpop.f32.mrb[0].mxu0
        %425 = vdwg.mxu0
        %v426 = vtanh.pop %v420
        %v427 = vtanh.pop %v423
        %v428 = vmax.f32 %v426, %v427
        %v429 = vrot.slane %v428, 4
        %v430 = vmax.f32 %v428, %v429
        %v431 = vrot.slane %v430, 2
        %v432 = vmax.f32 %v430, %v431
        %v433 = vrot.slane %v432, 1
        %v434 = vmax.f32 %v432, %v433
        %v435 = vpack.c.bf16 %v434, %v434
        %vm436 = vcmask 1040384
        %vm437 = vsmask.f32 256
        %vm438 = vmand %vm436, %vm437
        %v439 = vld [vmem:[%s181] sm:$0x1]
        %v440 = vsel %vm438, %v435, %v439
        %441 = vst [vmem:[%s181] sm:$0x1] %v440
        %p442 = scmp.lt.s32.totalorder %s15, 1
        %s443 = scalar_select %p442, %s15, 1
        %s444 = scalar_lea.vmem %s3, %s443
        // Predicated region
        $region37: #{tpu_custom_call.1} parent=31 // pred_check
          %p445 = pneg %p101
        $region38: #{tpu_custom_call.1} parent=31 // pred_check_branch
          %447 = sbr.rel (%p445) target = $region40
        $region39: #{tpu_custom_call.1} parent=31 // pred_region
          _
        $region40: #{tpu_custom_call.1} parent=31 // pred_fallthru
          _
      $region32: #{tpu_custom_call.1} parent=5 // pred_fallthru
        _
      %p448 = scmp.le.s32.totalorder 2, %s10
      // Predicated region
      $region41: #{tpu_custom_call.1} parent=5 // pred_check
        %p449 = pneg %p448
      $region42: #{tpu_custom_call.1} parent=5 // pred_check_branch
        %451 = sbr.rel (%p449) target = $region44
      $region43: #{tpu_custom_call.1} parent=5 // pred_region
        %s452 = ssub.s32 %s10, 2
        // Predicated region
        $region45: #{tpu_custom_call.1} parent=43 // pred_check
          %p453 = pneg %p107
        $region46: #{tpu_custom_call.1} parent=43 // pred_check_branch
          %455 = sbr.rel (%p453) target = $region48
        $region47: #{tpu_custom_call.1} parent=43 // pred_region
          %p456 = scmp.lt.s32.totalorder %s16, 1
          %s457 = scalar_select %p456, %s16, 1
          %s458 = scalar_lea.vmem %s3, %s457
        $region48: #{tpu_custom_call.1} parent=43 // pred_fallthru
          _
      $region44: #{tpu_custom_call.1} parent=5 // pred_fallthru
        _
    $region6: #{tpu_custom_call.1} parent=1 // loop_footer
      %s14 = sadd.s32 1, %s10
    $region7: #{tpu_custom_call.1} parent=1 // loop_footer_branch
      %9 = sbr.rel target = $region3
    $region8: #{tpu_custom_call.1} parent=1 // loop_exit
      _
    %459 = vsyncpa [#allocation4], 1
    %s460 = scalar_lea.sflag [#allocation4], 1
    %461 = vsyncpa %s460, 1

</llo_original>
